<compile_context>
chip_gen: v7x
topology: tpu7x:2x2x1
jax: 0.10.0
libtpu: 0.0.40
codegen_flags: <defaults>
</compile_context>

<pallas_src>
import numpy as np
import jax
import jax.numpy as jnp
from jax import lax
from jax.experimental import pallas as pl
from jax.experimental.pallas import tpu as pltpu


LANE = 128      # lane width: h_dim is padded to a multiple of this
TILE_G = 128    # groups per grid step  (MXU M)
TILE_R = 128    # neighbor rows per grid step (MXU K)


def _round_up(x, m):
    return ((x + m - 1) // m) * m


def _cdiv(a, b):
    return -(-a // b)


# ----------------------------------------------------------------------------
# Pallas kernel: ragged segment-mean as a per-tile MXU mask-matmul
# ----------------------------------------------------------------------------
def mean_aggregate(rows_bf16, g_off, g_len, tile_row_start, *,
                   h_pad, tile_g, tile_r, num_row_tiles):
    """means[g] = mean of neighbor rows belonging to group g (0 if empty)."""
    g_pad = g_off.shape[0]
    r_pad = rows_bf16.shape[0]
    n_row_blocks = r_pad // tile_r

    def kernel(rs_ref, off_ref, len_ref, rows_ref, out_ref):
        g = pl.program_id(0)
        r = pl.program_id(1)

        @pl.when(r == 0)
        def _():
            out_ref[...] = jnp.zeros_like(out_ref)

        # Global row indices of this row tile.  The index_map clamps the DMA to
        # the last real block; the mask uses the UNclamped index, so any
        # over-fetched (clamped) tile contributes exactly zero.
        row_block = rs_ref[g] + r
        row_idx = (row_block * tile_r
                   + lax.broadcasted_iota(jnp.int32, (tile_g, tile_r), 1))
        off = off_ref[...]                                   # [tile_g, 1] int32
        ln = len_ref[...]                                    # [tile_g, 1] int32

        # 0/1 membership mask -> bf16 so the segment-sum runs on the MXU.
        w = ((row_idx >= off) & (row_idx < off + ln)).astype(rows_ref.dtype)
        out_ref[...] += jnp.dot(w, rows_ref[...],
                                preferred_element_type=jnp.float32)

        @pl.when(r == pl.num_programs(1) - 1)
        def _():
            lnf = ln.astype(jnp.float32)
            inv = jnp.where(ln > 0, 1.0 / jnp.maximum(lnf, 1.0), 0.0)
            # single lane-dense [tile_g, h_pad] store (no masked row writes)
            out_ref[...] = out_ref[...] * inv

    return pl.pallas_call(
        kernel,
        out_shape=jax.ShapeDtypeStruct((g_pad, h_pad), jnp.float32),
        grid_spec=pltpu.PrefetchScalarGridSpec(
            num_scalar_prefetch=1,            # tile_row_start -> SMEM
            grid=(g_pad // tile_g, num_row_tiles),
            in_specs=[
                pl.BlockSpec((tile_g, 1), lambda g, r, rs: (g, 0)),     # g_off
                pl.BlockSpec((tile_g, 1), lambda g, r, rs: (g, 0)),     # g_len
                pl.BlockSpec(                                           # rows
                    (tile_r, h_pad),
                    lambda g, r, rs: (jnp.minimum(rs[g] + r,
                                                  n_row_blocks - 1), 0)),
            ],
            out_specs=pl.BlockSpec((tile_g, h_pad), lambda g, r, rs: (g, 0)),
        ),
        compiler_params=pltpu.CompilerParams(
            dimension_semantics=("parallel", "arbitrary")),
    )(tile_row_start, g_off, g_len, rows_bf16)


# ----------------------------------------------------------------------------
# Host-side glue reproducing get_sorted_s_r_embed + ragged bookkeeping
# ----------------------------------------------------------------------------
def prepare_inputs(s_hist, s, r, ent_embeds, rel_embeds, *,
                   tile_g, tile_r, lane=LANE):
    ent_embeds = np.asarray(ent_embeds, np.float32)
    rel_embeds = np.asarray(rel_embeds, np.float32)
    h_dim = ent_embeds.shape[1]
    h_pad = _round_up(h_dim, lane)

    # --- get_sorted_s_r_embed: sort subjects by history length, drop empties --
    hist_len = np.array([len(h) for h in s_hist])
    s_idx = np.argsort(-hist_len, kind="stable")
    s_len = hist_len[s_idx]
    num_non_zero = int(np.count_nonzero(s_len))
    s_len_non_zero = s_len[:num_non_zero]
    s_hist_sorted = [s_hist[i] for i in s_idx][:num_non_zero]
    s_tem = np.asarray(s)[s_idx][:num_non_zero]
    r_tem = np.asarray(r)[s_idx][:num_non_zero]

    # --- one group per (subject, timestep); groups contiguous in row space ---
    len_s, flat_s, g_sub, g_t = [], [], [], []
    for i, hist in enumerate(s_hist_sorted):
        for t, neighs in enumerate(hist):
            len_s.append(len(neighs))
            flat_s.extend(neighs)
            g_sub.append(i)
            g_t.append(t)
    num_groups = len(len_s)
    num_rows = len(flat_s)

    # neighbor rows: contiguous, lane-padded H, row count padded to the row
    # tile, stored in bf16 (halves HBM read bytes; f32 accumulation on MXU).
    r_pad = _round_up(max(num_rows, 1), tile_r)
    rows = np.zeros((r_pad, h_pad), np.float32)
    if num_rows:
        rows[:num_rows, :h_dim] = ent_embeds[np.asarray(flat_s, np.int64)]
    rows_bf16 = jnp.asarray(rows).astype(jnp.bfloat16)

    # per-group (row offset, length) as [G_pad, 1] int32 columns
    g_pad = _round_up(max(num_groups, 1), tile_g)
    g_off = np.zeros((g_pad, 1), np.int32)
    g_len = np.zeros((g_pad, 1), np.int32)
    if num_groups:
        starts = np.concatenate([[0], np.cumsum(len_s)[:-1]]).astype(np.int32)
        g_off[:num_groups, 0] = starts
        g_len[:num_groups, 0] = np.asarray(len_s, np.int32)

    # per group-tile: first row block + number of row tiles it spans.  The row
    # grid extent is the max span; shorter tiles mask the surplus to zero.
    n_group_tiles = g_pad // tile_g
    tile_row_start = np.zeros((n_group_tiles,), np.int32)
    num_row_tiles = 1
    for t in range(n_group_tiles):
        lo = t * tile_g
        hi = min((t + 1) * tile_g, num_groups)
        if hi <= lo:
            continue
        first_row = int(g_off[lo, 0])
        end_row = int(g_off[hi - 1, 0] + g_len[hi - 1, 0])
        rb0 = first_row // tile_r
        rb1 = max(_cdiv(max(end_row, first_row + 1), tile_r), rb0 + 1)
        tile_row_start[t] = rb0
        num_row_tiles = max(num_row_tiles, rb1 - rb0)

    return dict(h_dim=h_dim, h_pad=h_pad, num_groups=num_groups,
                num_rows=num_rows, rows_bf16=rows_bf16,
                g_off=g_off, g_len=g_len,
                tile_row_start=tile_row_start, num_row_tiles=num_row_tiles,
                s_len_non_zero=s_len_non_zero, s_tem=s_tem, r_tem=r_tem,
                len_s=len_s, flat_s=flat_s,
                g_sub=np.asarray(g_sub, np.int64),
                g_t=np.asarray(g_t, np.int64))


# ----------------------------------------------------------------------------
# Pure-numpy reference (on the same bf16-rounded rows) for correctness check
# ----------------------------------------------------------------------------
def reference_means(prep):
    rows_f32 = np.asarray(prep["rows_bf16"].astype(jnp.float32))
    h_dim = prep["h_dim"]
    ref = np.zeros((prep["num_groups"], h_dim), np.float32)
    curr = 0
    for g, leng in enumerate(prep["len_s"]):
        if leng > 0:
            # NOTE: the torch original yields NaN (0/0) for an empty group; the
            # kernel guards it to 0 (no empty groups in this example).
            ref[g] = rows_f32[curr:curr + leng, :h_dim].mean(axis=0)
        curr += leng
    return ref


if __name__ == "__main__":
    h_dim = 32
    seq_len = 10
    num_ents, num_rels = 10, 5

    key = jax.random.PRNGKey(0)
    k1, k2 = jax.random.split(key)
    ent_embeds = jax.random.normal(k1, (num_ents, h_dim), dtype=jnp.float32)
    rel_embeds = jax.random.normal(k2, (num_rels, h_dim), dtype=jnp.float32)

    # small deterministic ragged history: subject -> list of neighbor lists
    s_hist = [
        [[1, 2], [3]],
        [[4, 5, 6]],
        [[7], [8, 9], [0, 1]],
    ]
    s = [0, 1, 2]
    r = [0, 1, 2]

    prep = prepare_inputs(s_hist, s, r, np.asarray(ent_embeds),
                          np.asarray(rel_embeds),
                          tile_g=TILE_G, tile_r=TILE_R, lane=LANE)

    means_pad = mean_aggregate(
        prep["rows_bf16"],
        jnp.asarray(prep["g_off"]),
        jnp.asarray(prep["g_len"]),
        jnp.asarray(prep["tile_row_start"]),
        h_pad=prep["h_pad"], tile_g=TILE_G, tile_r=TILE_R,
        num_row_tiles=prep["num_row_tiles"])
    jax.block_until_ready(means_pad)

    G = prep["num_groups"]
    embeds_mean = np.asarray(means_pad)[:G, :h_dim]       # torch embeds_mean

    ref = reference_means(prep)
    np.testing.assert_allclose(embeds_mean, ref, rtol=1e-4, atol=1e-5)

    # ------------------------------------------------------------------
    # Remaining forward steps: [mean | ent[s] | rel[r]] placement into the
    # padded sequence tensor and pack_padded_sequence — host indexing glue
    # (kept out of the memory-bound kernel: ss/rr pass-through was 2/3 of
    # its HBM output bytes and is just embedding-table row placement).
    # ------------------------------------------------------------------
    ent_np = np.asarray(ent_embeds)
    rel_np = np.asarray(rel_embeds)
    g_sub, g_t = prep["g_sub"], prep["g_t"]
    B = len(prep["s_len_non_zero"])
    seq_tensor = np.zeros((B, seq_len, 3 * h_dim), np.float32)
    seq_tensor[g_sub, g_t] = np.concatenate(
        [embeds_mean,
         ent_np[prep["s_tem"][g_sub]],
         rel_np[prep["r_tem"][g_sub]]], axis=1)
    # TODO(synk): nn.Dropout applied as identity (eval mode) and the gcn=True
    # Linear+ReLU branch (default gcn=False) are not kernelized here.

    # pack_padded_sequence(batch_first=True) == timestep-major row permutation
    lens = np.asarray(prep["s_len_non_zero"])
    batch_sizes = np.array([int(np.sum(lens > t)) for t in range(int(lens[0]))])
    packed_data = np.concatenate([seq_tensor[:bs, t, :]
                                  for t, bs in enumerate(batch_sizes)], axis=0)
    assert packed_data.shape == (int(lens.sum()), 3 * h_dim)

    print("KERNEL_OK")
</pallas_src>

<mosaic_0001>
module attributes {stable_mosaic.version = 11 : i64} {
  func.func @kernel(%arg0: i32, %arg1: i32, %arg2: memref<1xi32, #tpu.memory_space<smem>>, %arg3: memref<128x1xi32, #tpu.memory_space<vmem>>, %arg4: memref<128x1xi32, #tpu.memory_space<vmem>>, %arg5: memref<128x128xbf16, #tpu.memory_space<vmem>>, %arg6: memref<128x128xf32, #tpu.memory_space<vmem>>) attributes {dimension_semantics = [#tpu.dimension_semantics<parallel>, #tpu.dimension_semantics<arbitrary>], iteration_bounds = array<i64: 1, 1>, scalar_prefetch = 1 : i64, scratch_operands = 0 : i64, tpu.core_type = #tpu.core_type<tc>, window_params = [{transform_indices = @transform_0, window_bounds = array<i64: 128, 1>}, {transform_indices = @transform_1, window_bounds = array<i64: 128, 1>}, {transform_indices = @transform_2, window_bounds = array<i64: 128, 128>}, {transform_indices = @transform_3, window_bounds = array<i64: 128, 128>}]} {
    %c0_i32 = arith.constant 0 : i32
    %0 = arith.cmpi eq, %arg1, %c0_i32 : i32
    %1 = arith.extui %0 : i1 to i32
    %c0_i32_0 = arith.constant 0 : i32
    %2 = arith.cmpi ne, %1, %c0_i32_0 : i32
    scf.if %2 {
      %cst_12 = arith.constant 0.000000e+00 : f32
      %29 = vector.broadcast %cst_12 : f32 to vector<128x128xf32>
      %c0_13 = arith.constant 0 : index
      %c0_14 = arith.constant 0 : index
      %30 = vector.load %arg6[%c0_13, %c0_14] : memref<128x128xf32, #tpu.memory_space<vmem>>, vector<128x128xf32>
      tpu.vector_store %arg6[%c0_13, %c0_14], %29 {strides = array<i32>} : memref<128x128xf32, #tpu.memory_space<vmem>>, vector<128x128xf32>,
    } else {
    }
    %3 = arith.index_cast %arg0 : i32 to index
    %4 = memref.load %arg2[%3] : memref<1xi32, #tpu.memory_space<smem>>
    %5 = arith.addi %4, %arg1 : i32
    %c128_i32 = arith.constant 128 : i32
    %6 = arith.muli %5, %c128_i32 : i32
    %7 = tpu.iota {dimensions = array<i32: 1>} : vector<128x128xi32>
    %8 = vector.broadcast %6 : i32 to vector<128x128xi32>
    %9 = arith.addi %8, %7 : vector<128x128xi32>
    %c0 = arith.constant 0 : index
    %c0_1 = arith.constant 0 : index
    %10 = vector.load %arg3[%c0, %c0_1] : memref<128x1xi32, #tpu.memory_space<vmem>>, vector<128x1xi32>
    %c0_2 = arith.constant 0 : index
    %c0_3 = arith.constant 0 : index
    %11 = vector.load %arg4[%c0_2, %c0_3] : memref<128x1xi32, #tpu.memory_space<vmem>>, vector<128x1xi32>
    %12 = vector.broadcast %10 : vector<128x1xi32> to vector<128x128xi32>
    %13 = arith.cmpi sge, %9, %12 : vector<128x128xi32>
    %14 = arith.addi %10, %11 : vector<128x1xi32>
    %15 = vector.broadcast %14 : vector<128x1xi32> to vector<128x128xi32>
    %16 = arith.cmpi slt, %9, %15 : vector<128x128xi32>
    %17 = arith.andi %13, %16 : vector<128x128xi1>
    %18 = arith.extui %17 : vector<128x128xi1> to vector<128x128xi32>
    %19 = arith.sitofp %18 : vector<128x128xi32> to vector<128x128xf32>
    %20 = arith.truncf %19 : vector<128x128xf32> to vector<128x128xbf16>
    %c0_4 = arith.constant 0 : index
    %c0_5 = arith.constant 0 : index
    %21 = vector.load %arg6[%c0_4, %c0_5] : memref<128x128xf32, #tpu.memory_space<vmem>>, vector<128x128xf32>
    %c0_6 = arith.constant 0 : index
    %c0_7 = arith.constant 0 : index
    %22 = vector.load %arg5[%c0_6, %c0_7] : memref<128x128xbf16, #tpu.memory_space<vmem>>, vector<128x128xbf16>
    %cst = arith.constant dense<0.000000e+00> : vector<128x128xf32>
    %23 = tpu.matmul %20, %22, %cst {dimension_numbers = #tpu.dot_dimension_numbers<[1], [0], [0], [1], [0, 0, 1, 1], [], []>} : vector<128x128xbf16>, vector<128x128xbf16>, vector<128x128xf32> -> vector<128x128xf32>
    %24 = arith.addf %21, %23 : vector<128x128xf32>
    %c0_8 = arith.constant 0 : index
    %c0_9 = arith.constant 0 : index
    %25 = vector.load %arg6[%c0_8, %c0_9] : memref<128x128xf32, #tpu.memory_space<vmem>>, vector<128x128xf32>
    tpu.vector_store %arg6[%c0_8, %c0_9], %24 {strides = array<i32>} : memref<128x128xf32, #tpu.memory_space<vmem>>, vector<128x128xf32>,
    %c0_i32_10 = arith.constant 0 : i32
    %26 = arith.cmpi eq, %arg1, %c0_i32_10 : i32
    %27 = arith.extui %26 : i1 to i32
    %c0_i32_11 = arith.constant 0 : i32
    %28 = arith.cmpi ne, %27, %c0_i32_11 : i32
    scf.if %28 {
      %29 = arith.sitofp %11 : vector<128x1xi32> to vector<128x1xf32>
      %c0_i32_12 = arith.constant 0 : i32
      %30 = vector.broadcast %c0_i32_12 : i32 to vector<128x1xi32>
      %31 = arith.cmpi sgt, %11, %30 : vector<128x1xi32>
      %cst_13 = arith.constant 1.000000e+00 : f32
      %32 = vector.broadcast %cst_13 : f32 to vector<128x1xf32>
      %33 = arith.maximumf %29, %32 : vector<128x1xf32>
      %cst_14 = arith.constant 1.000000e+00 : f32
      %34 = vector.broadcast %cst_14 : f32 to vector<128x1xf32>
      %35 = arith.divf %34, %33 : vector<128x1xf32>
      %cst_15 = arith.constant 0.000000e+00 : f32
      %36 = vector.broadcast %cst_15 : f32 to vector<128x1xf32>
      %37 = arith.select %31, %35, %36 : vector<128x1xi1>, vector<128x1xf32>
      %c0_16 = arith.constant 0 : index
      %c0_17 = arith.constant 0 : index
      %38 = vector.load %arg6[%c0_16, %c0_17] : memref<128x128xf32, #tpu.memory_space<vmem>>, vector<128x128xf32>
      %39 = vector.broadcast %37 : vector<128x1xf32> to vector<128x128xf32>
      %40 = arith.mulf %38, %39 : vector<128x128xf32>
      %c0_18 = arith.constant 0 : index
      %c0_19 = arith.constant 0 : index
      %41 = vector.load %arg6[%c0_18, %c0_19] : memref<128x128xf32, #tpu.memory_space<vmem>>, vector<128x128xf32>
      tpu.vector_store %arg6[%c0_18, %c0_19], %40 {strides = array<i32>} : memref<128x128xf32, #tpu.memory_space<vmem>>, vector<128x128xf32>,
    } else {
    }
    return
  }
  func.func @transform_0(%arg0: i32, %arg1: i32, %arg2: memref<1xi32, #tpu.memory_space<smem>>) -> (i32, i32) {
    %c0_i32 = arith.constant 0 : i32
    %c0_i32_0 = arith.constant 0 : i32
    return %arg0, %c0_i32 : i32, i32
  }
  func.func @transform_1(%arg0: i32, %arg1: i32, %arg2: memref<1xi32, #tpu.memory_space<smem>>) -> (i32, i32) {
    %c0_i32 = arith.constant 0 : i32
    %c0_i32_0 = arith.constant 0 : i32
    return %arg0, %c0_i32 : i32, i32
  }
  func.func @transform_2(%arg0: i32, %arg1: i32, %arg2: memref<1xi32, #tpu.memory_space<smem>>) -> (i32, i32) {
    %0 = arith.index_cast %arg0 : i32 to index
    %1 = memref.load %arg2[%0] : memref<1xi32, #tpu.memory_space<smem>>
    %2 = arith.addi %1, %arg1 : i32
    %c0_i32 = arith.constant 0 : i32
    %3 = arith.minsi %2, %c0_i32 : i32
    %c0_i32_0 = arith.constant 0 : i32
    %c0_i32_1 = arith.constant 0 : i32
    return %3, %c0_i32_0 : i32, i32
  }
  func.func @transform_3(%arg0: i32, %arg1: i32, %arg2: memref<1xi32, #tpu.memory_space<smem>>) -> (i32, i32) {
    %c0_i32 = arith.constant 0 : i32
    %c0_i32_0 = arith.constant 0 : i32
    return %arg0, %c0_i32 : i32, i32
  }
}

</mosaic_0001>

<llo_original>
// kernel: tpu_custom_call.1
$region0: #{tpu_custom_call.1}
  #allocation0 [shape = 'u32[]', space=smem, size = 0x4, offset = 0x4, fixed_abs, tag = 'smem constant byte address 0x4 - core index']
  #allocation1 [shape = 'u32[144,128]{1,0:T(1,128)}', space=vmem, size = 0x12000, scoped, tag = 'internal scratch']
  #allocation2 [shape = 's32[1]{0}', space=sflag, size = 0x4, scoped, tag = 'scoped memory for tpu_custom_call.1']
  #allocation3 [shape = 's32[1]{0:T(128)S(6)}', space=smem, size = 0x200, scoped, tag = 'prefetched SMEM operand 0']
  %s0 = inlined_call_operand.<no memory space> [shape: s32[1], index: 0, kind: input, shape index: {}]
  %s1 = inlined_call_operand.vmem [shape: s32[128,1], index: 1, kind: input, shape index: {}]
  %s2 = inlined_call_operand.vmem [shape: s32[128,1], index: 2, kind: input, shape index: {}]
  %s3 = inlined_call_operand.vmem [shape: bf16[128,128], index: 3, kind: input, shape index: {}]
  %s4 = inlined_call_operand.hbm [shape: f32[128,128], index: 4, kind: output, shape index: {}]
  %s5 = sld [smem:[#allocation0]]
  $region30: #{tpu_custom_call.1} parent=0
    _
  %s7 = ssub.s32 1, %s5
  %s8 = scalar_select 0, %s7, %s5
  %9 = sst [smem:[#allocation3]] %s0
  $region1: #{tpu_custom_call.1} parent=0
    #allocation4 [shape = 'u8[65536]{0}', space=vmem, size = 0x10000, scoped, tag = 'output window, operand 0, single buffered']
    #allocation5 [shape = 's32[1]{0}', space=sflag, size = 0x4, scoped, tag = 'scoped memory for tpu_custom_call.1']
    %10 = vsyncpa [#allocation5], 0
    // Predicated region
    $region2: #{tpu_custom_call.1} parent=1 // pred_check
      _
    $region3: #{tpu_custom_call.1} parent=1 // pred_check_branch
      %12 = sbr.rel (0) target = $region5
    $region4: #{tpu_custom_call.1} parent=1 // pred_region
      _
    $region5: #{tpu_custom_call.1} parent=1 // pred_fallthru
      _
    // Predicated region
    $region6: #{tpu_custom_call.1} parent=1 // pred_check
      _
    $region7: #{tpu_custom_call.1} parent=1 // pred_check_branch
      %14 = sbr.rel (0) target = $region9
    $region8: #{tpu_custom_call.1} parent=1 // pred_region
      _
    $region9: #{tpu_custom_call.1} parent=1 // pred_fallthru
      _
    // Predicated region
    $region10: #{tpu_custom_call.1} parent=1 // pred_check
      _
    $region11: #{tpu_custom_call.1} parent=1 // pred_check_branch
      %16 = sbr.rel (0) target = $region13
    $region12: #{tpu_custom_call.1} parent=1 // pred_region
      %s17 = sld [smem:[#allocation3]]
      %s18 = sadd.s32 %s17, 0
      %p19 = scmp.lt.s32.totalorder %s18, 0
      %s20 = scalar_select %p19, %s18, 0
      %s21 = smul.u32 16, %s20
      %p22 = scmp.lt.s32.totalorder %s21, 15
      %s23 = scalar_select %p22, %s21, 15
      %s24 = smul.addr %s23, 4
      %s25 = scalar_lea.vmem %s3, %s24
      %s26 = sld [smem:[#allocation3]]
      %s27 = sadd.s32 %s26, 0
      %p28 = scmp.lt.s32.totalorder %s27, 0
      %s29 = scalar_select %p28, %s27, 0
      %s30 = smul.u32 16, %s29
    $region13: #{tpu_custom_call.1} parent=1 // pred_fallthru
      _
    %s31 = sld [smem:[#allocation3]]
    %s32 = sadd.s32 %s31, 0
    %p33 = scmp.lt.s32.totalorder %s32, 0
    %s34 = scalar_select %p33, %s32, 0
    %s35 = smul.u32 16, %s34
    %p36 = scmp.lt.s32.totalorder %s35, 15
    %s37 = scalar_select %p36, %s35, 15
    %s38 = smul.addr %s37, 4
    %s39 = scalar_lea.vmem %s3, %s38
    %s40 = sld [smem:[#allocation3]]
    %s41 = sadd.s32 %s40, 0
    %p42 = scmp.lt.s32.totalorder %s41, 0
    %s43 = scalar_select %p42, %s41, 0
    %s44 = smul.u32 16, %s43
    %p45 = scmp.lt.s32.totalorder %s44, 15
    %s46 = scalar_select %p45, %s44, 15
    %s47 = smul.addr %s46, 4
    %s48 = scalar_lea.vmem %s3, %s47
    %s49 = sld [smem:[#allocation3]]
    %s50 = sadd.s32 %s49, 0
    %p51 = scmp.lt.s32.totalorder %s50, 0
    %s52 = scalar_select %p51, %s50, 0
    %s53 = smul.u32 16, %s52
    %p55 = scmp.eq.s32.totalorder 0, 0
    // Predicated region
    $region14: #{tpu_custom_call.1} parent=1 // pred_check
      %p56 = pneg %p55
    $region15: #{tpu_custom_call.1} parent=1 // pred_check_branch
      %58 = sbr.rel (%p56) target = $region17
    $region16: #{tpu_custom_call.1} parent=1 // pred_region
      %59 = vst [vmem:[#allocation4] sm:$0xff] 0.0
      %60 = vst [vmem:[#allocation4 + $0x8] sm:$0xff] 0.0
      %61 = vst [vmem:[#allocation4 + $0x10] sm:$0xff] 0.0
      %62 = vst [vmem:[#allocation4 + $0x18] sm:$0xff] 0.0
      %63 = vst [vmem:[#allocation4 + $0x20] sm:$0xff] 0.0
      %64 = vst [vmem:[#allocation4 + $0x28] sm:$0xff] 0.0
      %65 = vst [vmem:[#allocation4 + $0x30] sm:$0xff] 0.0
      %66 = vst [vmem:[#allocation4 + $0x38] sm:$0xff] 0.0
      %67 = vst [vmem:[#allocation4 + $0x40] sm:$0xff] 0.0
      %68 = vst [vmem:[#allocation4 + $0x48] sm:$0xff] 0.0
      %69 = vst [vmem:[#allocation4 + $0x50] sm:$0xff] 0.0
      %70 = vst [vmem:[#allocation4 + $0x58] sm:$0xff] 0.0
      %71 = vst [vmem:[#allocation4 + $0x60] sm:$0xff] 0.0
      %72 = vst [vmem:[#allocation4 + $0x68] sm:$0xff] 0.0
      %73 = vst [vmem:[#allocation4 + $0x70] sm:$0xff] 0.0
      %74 = vst [vmem:[#allocation4 + $0x78] sm:$0xff] 0.0
    $region17: #{tpu_custom_call.1} parent=1 // pred_fallthru
      _
    %s75 = sld [smem:[#allocation3]]
    %s76 = sadd.s32 %s75, 0
    %s77 = smul.u32 %s76, 128
    %v78 = vlaneseq
    %v79 = vand.u32 %v78, 127
    %v80 = vstv %s77
    %v81 = vadd.s32 %v80, %v79
    %v82 = vld [vmem:[%s1] sm:$0xff]
    %v83 = vld [vmem:[%s1 + $0x8] sm:$0xff]
    %v84 = vld [vmem:[%s1 + $0x10] sm:$0xff]
    %v85 = vld [vmem:[%s1 + $0x18] sm:$0xff]
    %v86 = vld [vmem:[%s1 + $0x20] sm:$0xff]
    %v87 = vld [vmem:[%s1 + $0x28] sm:$0xff]
    %v88 = vld [vmem:[%s1 + $0x30] sm:$0xff]
    %v89 = vld [vmem:[%s1 + $0x38] sm:$0xff]
    %v90 = vld [vmem:[%s1 + $0x40] sm:$0xff]
    %v91 = vld [vmem:[%s1 + $0x48] sm:$0xff]
    %v92 = vld [vmem:[%s1 + $0x50] sm:$0xff]
    %v93 = vld [vmem:[%s1 + $0x58] sm:$0xff]
    %v94 = vld [vmem:[%s1 + $0x60] sm:$0xff]
    %v95 = vld [vmem:[%s1 + $0x68] sm:$0xff]
    %v96 = vld [vmem:[%s1 + $0x70] sm:$0xff]
    %v97 = vld [vmem:[%s1 + $0x78] sm:$0xff]
    %v98 = vld [vmem:[%s2] sm:$0xff]
    %v99 = vld [vmem:[%s2 + $0x8] sm:$0xff]
    %v100 = vld [vmem:[%s2 + $0x10] sm:$0xff]
    %v101 = vld [vmem:[%s2 + $0x18] sm:$0xff]
    %v102 = vld [vmem:[%s2 + $0x20] sm:$0xff]
    %v103 = vld [vmem:[%s2 + $0x28] sm:$0xff]
    %v104 = vld [vmem:[%s2 + $0x30] sm:$0xff]
    %v105 = vld [vmem:[%s2 + $0x38] sm:$0xff]
    %v106 = vld [vmem:[%s2 + $0x40] sm:$0xff]
    %v107 = vld [vmem:[%s2 + $0x48] sm:$0xff]
    %v108 = vld [vmem:[%s2 + $0x50] sm:$0xff]
    %v109 = vld [vmem:[%s2 + $0x58] sm:$0xff]
    %v110 = vld [vmem:[%s2 + $0x60] sm:$0xff]
    %v111 = vld [vmem:[%s2 + $0x68] sm:$0xff]
    %v112 = vld [vmem:[%s2 + $0x70] sm:$0xff]
    %v113 = vld [vmem:[%s2 + $0x78] sm:$0xff]
    %114 = vset.pattern.permute.xlu0 0
    %115 = vperm.xlu0 %114, %v82
    %v116 = vpop.permute.xlu0 %115
    %117 = vset.pattern.permute.xlu0 0
    %118 = vperm.xlu0 %117, %v83
    %v119 = vpop.permute.xlu0 %118
    %120 = vset.pattern.permute.xlu0 0
    %121 = vperm.xlu0 %120, %v84
    %v122 = vpop.permute.xlu0 %121
    %123 = vset.pattern.permute.xlu0 0
    %124 = vperm.xlu0 %123, %v85
    %v125 = vpop.permute.xlu0 %124
    %126 = vset.pattern.permute.xlu0 0
    %127 = vperm.xlu0 %126, %v86
    %v128 = vpop.permute.xlu0 %127
    %129 = vset.pattern.permute.xlu0 0
    %130 = vperm.xlu0 %129, %v87
    %v131 = vpop.permute.xlu0 %130
    %132 = vset.pattern.permute.xlu0 0
    %133 = vperm.xlu0 %132, %v88
    %v134 = vpop.permute.xlu0 %133
    %135 = vset.pattern.permute.xlu0 0
    %136 = vperm.xlu0 %135, %v89
    %v137 = vpop.permute.xlu0 %136
    %138 = vset.pattern.permute.xlu0 0
    %139 = vperm.xlu0 %138, %v90
    %v140 = vpop.permute.xlu0 %139
    %141 = vset.pattern.permute.xlu0 0
    %142 = vperm.xlu0 %141, %v91
    %v143 = vpop.permute.xlu0 %142
    %144 = vset.pattern.permute.xlu0 0
    %145 = vperm.xlu0 %144, %v92
    %v146 = vpop.permute.xlu0 %145
    %147 = vset.pattern.permute.xlu0 0
    %148 = vperm.xlu0 %147, %v93
    %v149 = vpop.permute.xlu0 %148
    %150 = vset.pattern.permute.xlu0 0
    %151 = vperm.xlu0 %150, %v94
    %v152 = vpop.permute.xlu0 %151
    %153 = vset.pattern.permute.xlu0 0
    %154 = vperm.xlu0 %153, %v95
    %v155 = vpop.permute.xlu0 %154
    %156 = vset.pattern.permute.xlu0 0
    %157 = vperm.xlu0 %156, %v96
    %v158 = vpop.permute.xlu0 %157
    %159 = vset.pattern.permute.xlu0 0
    %160 = vperm.xlu0 %159, %v97
    %v161 = vpop.permute.xlu0 %160
    %vm162 = vcmp.ge.s32.totalorder %v81, %v116
    %vm163 = vcmp.ge.s32.totalorder %v81, %v119
    %vm164 = vcmp.ge.s32.totalorder %v81, %v122
    %vm165 = vcmp.ge.s32.totalorder %v81, %v125
    %vm166 = vcmp.ge.s32.totalorder %v81, %v128
    %vm167 = vcmp.ge.s32.totalorder %v81, %v131
    %vm168 = vcmp.ge.s32.totalorder %v81, %v134
    %vm169 = vcmp.ge.s32.totalorder %v81, %v137
    %vm170 = vcmp.ge.s32.totalorder %v81, %v140
    %vm171 = vcmp.ge.s32.totalorder %v81, %v143
    %vm172 = vcmp.ge.s32.totalorder %v81, %v146
    %vm173 = vcmp.ge.s32.totalorder %v81, %v149
    %vm174 = vcmp.ge.s32.totalorder %v81, %v152
    %vm175 = vcmp.ge.s32.totalorder %v81, %v155
    %vm176 = vcmp.ge.s32.totalorder %v81, %v158
    %vm177 = vcmp.ge.s32.totalorder %v81, %v161
    %v178 = vadd.s32 %v82, %v98
    %v179 = vadd.s32 %v83, %v99
    %v180 = vadd.s32 %v84, %v100
    %v181 = vadd.s32 %v85, %v101
    %v182 = vadd.s32 %v86, %v102
    %v183 = vadd.s32 %v87, %v103
    %v184 = vadd.s32 %v88, %v104
    %v185 = vadd.s32 %v89, %v105
    %v186 = vadd.s32 %v90, %v106
    %v187 = vadd.s32 %v91, %v107
    %v188 = vadd.s32 %v92, %v108
    %v189 = vadd.s32 %v93, %v109
    %v190 = vadd.s32 %v94, %v110
    %v191 = vadd.s32 %v95, %v111
    %v192 = vadd.s32 %v96, %v112
    %v193 = vadd.s32 %v97, %v113
    %194 = vset.pattern.permute.xlu0 0
    %195 = vperm.xlu0 %194, %v178
    %v196 = vpop.permute.xlu0 %195
    %197 = vset.pattern.permute.xlu0 0
    %198 = vperm.xlu0 %197, %v179
    %v199 = vpop.permute.xlu0 %198
    %200 = vset.pattern.permute.xlu0 0
    %201 = vperm.xlu0 %200, %v180
    %v202 = vpop.permute.xlu0 %201
    %203 = vset.pattern.permute.xlu0 0
    %204 = vperm.xlu0 %203, %v181
    %v205 = vpop.permute.xlu0 %204
    %206 = vset.pattern.permute.xlu0 0
    %207 = vperm.xlu0 %206, %v182
    %v208 = vpop.permute.xlu0 %207
    %209 = vset.pattern.permute.xlu0 0
    %210 = vperm.xlu0 %209, %v183
    %v211 = vpop.permute.xlu0 %210
    %212 = vset.pattern.permute.xlu0 0
    %213 = vperm.xlu0 %212, %v184
    %v214 = vpop.permute.xlu0 %213
    %215 = vset.pattern.permute.xlu0 0
    %216 = vperm.xlu0 %215, %v185
    %v217 = vpop.permute.xlu0 %216
    %218 = vset.pattern.permute.xlu0 0
    %219 = vperm.xlu0 %218, %v186
    %v220 = vpop.permute.xlu0 %219
    %221 = vset.pattern.permute.xlu0 0
    %222 = vperm.xlu0 %221, %v187
    %v223 = vpop.permute.xlu0 %222
    %224 = vset.pattern.permute.xlu0 0
    %225 = vperm.xlu0 %224, %v188
    %v226 = vpop.permute.xlu0 %225
    %227 = vset.pattern.permute.xlu0 0
    %228 = vperm.xlu0 %227, %v189
    %v229 = vpop.permute.xlu0 %228
    %230 = vset.pattern.permute.xlu0 0
    %231 = vperm.xlu0 %230, %v190
    %v232 = vpop.permute.xlu0 %231
    %233 = vset.pattern.permute.xlu0 0
    %234 = vperm.xlu0 %233, %v191
    %v235 = vpop.permute.xlu0 %234
    %236 = vset.pattern.permute.xlu0 0
    %237 = vperm.xlu0 %236, %v192
    %v238 = vpop.permute.xlu0 %237
    %239 = vset.pattern.permute.xlu0 0
    %240 = vperm.xlu0 %239, %v193
    %v241 = vpop.permute.xlu0 %240
    %vm242 = vcmp.lt.s32.totalorder %v81, %v196
    %vm243 = vcmp.lt.s32.totalorder %v81, %v199
    %vm244 = vcmp.lt.s32.totalorder %v81, %v202
    %vm245 = vcmp.lt.s32.totalorder %v81, %v205
    %vm246 = vcmp.lt.s32.totalorder %v81, %v208
    %vm247 = vcmp.lt.s32.totalorder %v81, %v211
    %vm248 = vcmp.lt.s32.totalorder %v81, %v214
    %vm249 = vcmp.lt.s32.totalorder %v81, %v217
    %vm250 = vcmp.lt.s32.totalorder %v81, %v220
    %vm251 = vcmp.lt.s32.totalorder %v81, %v223
    %vm252 = vcmp.lt.s32.totalorder %v81, %v226
    %vm253 = vcmp.lt.s32.totalorder %v81, %v229
    %vm254 = vcmp.lt.s32.totalorder %v81, %v232
    %vm255 = vcmp.lt.s32.totalorder %v81, %v235
    %vm256 = vcmp.lt.s32.totalorder %v81, %v238
    %vm257 = vcmp.lt.s32.totalorder %v81, %v241
    %vm258 = vmand %vm162, %vm242
    %vm259 = vmand %vm163, %vm243
    %vm260 = vmand %vm164, %vm244
    %vm261 = vmand %vm165, %vm245
    %vm262 = vmand %vm166, %vm246
    %vm263 = vmand %vm167, %vm247
    %vm264 = vmand %vm168, %vm248
    %vm265 = vmand %vm169, %vm249
    %vm266 = vmand %vm170, %vm250
    %vm267 = vmand %vm171, %vm251
    %vm268 = vmand %vm172, %vm252
    %vm269 = vmand %vm173, %vm253
    %vm270 = vmand %vm174, %vm254
    %vm271 = vmand %vm175, %vm255
    %vm272 = vmand %vm176, %vm256
    %vm273 = vmand %vm177, %vm257
    %v274 = vsel %vm258, 1, 0
    %v275 = vsel %vm259, 1, 0
    %v276 = vsel %vm260, 1, 0
    %v277 = vsel %vm261, 1, 0
    %v278 = vsel %vm262, 1, 0
    %v279 = vsel %vm263, 1, 0
    %v280 = vsel %vm264, 1, 0
    %v281 = vsel %vm265, 1, 0
    %v282 = vsel %vm266, 1, 0
    %v283 = vsel %vm267, 1, 0
    %v284 = vsel %vm268, 1, 0
    %v285 = vsel %vm269, 1, 0
    %v286 = vsel %vm270, 1, 0
    %v287 = vsel %vm271, 1, 0
    %v288 = vsel %vm272, 1, 0
    %v289 = vsel %vm273, 1, 0
    %v290 = vcvt.s32.f32 %v274
    %v291 = vcvt.s32.f32 %v275
    %v292 = vcvt.s32.f32 %v276
    %v293 = vcvt.s32.f32 %v277
    %v294 = vcvt.s32.f32 %v278
    %v295 = vcvt.s32.f32 %v279
    %v296 = vcvt.s32.f32 %v280
    %v297 = vcvt.s32.f32 %v281
    %v298 = vcvt.s32.f32 %v282
    %v299 = vcvt.s32.f32 %v283
    %v300 = vcvt.s32.f32 %v284
    %v301 = vcvt.s32.f32 %v285
    %v302 = vcvt.s32.f32 %v286
    %v303 = vcvt.s32.f32 %v287
    %v304 = vcvt.s32.f32 %v288
    %v305 = vcvt.s32.f32 %v289
    %v306 = vpack.c.bf16 %v291, %v290
    %v307 = vpack.c.bf16 %v293, %v292
    %v308 = vpack.c.bf16 %v295, %v294
    %v309 = vpack.c.bf16 %v297, %v296
    %v310 = vpack.c.bf16 %v299, %v298
    %v311 = vpack.c.bf16 %v301, %v300
    %v312 = vpack.c.bf16 %v303, %v302
    %v313 = vpack.c.bf16 %v305, %v304
    %v314 = vld [vmem:[#allocation4] sm:$0xff]
    %v315 = vld [vmem:[#allocation4 + $0x8] sm:$0xff]
    %v316 = vld [vmem:[#allocation4 + $0x10] sm:$0xff]
    %v317 = vld [vmem:[#allocation4 + $0x18] sm:$0xff]
    %v318 = vld [vmem:[#allocation4 + $0x20] sm:$0xff]
    %v319 = vld [vmem:[#allocation4 + $0x28] sm:$0xff]
    %v320 = vld [vmem:[#allocation4 + $0x30] sm:$0xff]
    %v321 = vld [vmem:[#allocation4 + $0x38] sm:$0xff]
    %v322 = vld [vmem:[#allocation4 + $0x40] sm:$0xff]
    %v323 = vld [vmem:[#allocation4 + $0x48] sm:$0xff]
    %v324 = vld [vmem:[#allocation4 + $0x50] sm:$0xff]
    %v325 = vld [vmem:[#allocation4 + $0x58] sm:$0xff]
    %v326 = vld [vmem:[#allocation4 + $0x60] sm:$0xff]
    %v327 = vld [vmem:[#allocation4 + $0x68] sm:$0xff]
    %v328 = vld [vmem:[#allocation4 + $0x70] sm:$0xff]
    %v329 = vld [vmem:[#allocation4 + $0x78] sm:$0xff]
    %v330 = vld [vmem:[%s48] sm:$0xf]
    %v331 = vld [vmem:[%s48 + $0x4] sm:$0xf]
    %v332 = vld [vmem:[%s48 + $0x8] sm:$0xf]
    %v333 = vld [vmem:[%s48 + $0xc] sm:$0xf]
    %v334 = vld [vmem:[%s48 + $0x10] sm:$0xf]
    %v335 = vld [vmem:[%s48 + $0x14] sm:$0xf]
    %v336 = vld [vmem:[%s48 + $0x18] sm:$0xf]
    %v337 = vld [vmem:[%s48 + $0x1c] sm:$0xf]
    %v338 = vld [vmem:[%s48 + $0x20] sm:$0xf]
    %v339 = vld [vmem:[%s48 + $0x24] sm:$0xf]
    %v340 = vld [vmem:[%s48 + $0x28] sm:$0xf]
    %v341 = vld [vmem:[%s48 + $0x2c] sm:$0xf]
    %v342 = vld [vmem:[%s48 + $0x30] sm:$0xf]
    %v343 = vld [vmem:[%s48 + $0x34] sm:$0xf]
    %v344 = vld [vmem:[%s48 + $0x38] sm:$0xf]
    %v345 = vld [vmem:[%s48 + $0x3c] sm:$0xf]
    %v362 = vunpack.c.l.b16 %v330
    %v363 = vunpack.c.l.b16 %v331
    %v364 = vunpack.c.l.b16 %v332
    %v365 = vunpack.c.l.b16 %v333
    %v366 = vunpack.c.l.b16 %v334
    %v367 = vunpack.c.l.b16 %v335
    %v368 = vunpack.c.l.b16 %v336
    %v369 = vunpack.c.l.b16 %v337
    %v370 = vunpack.c.l.b16 %v338
    %v371 = vunpack.c.l.b16 %v339
    %v372 = vunpack.c.l.b16 %v340
    %v373 = vunpack.c.l.b16 %v341
    %v374 = vunpack.c.l.b16 %v342
    %v375 = vunpack.c.l.b16 %v343
    %v376 = vunpack.c.l.b16 %v344
    %v377 = vunpack.c.l.b16 %v345
    %v378 = vpack.c.b16 %v363, %v362
    %v379 = vpack.c.b16 %v365, %v364
    %v380 = vpack.c.b16 %v367, %v366
    %v381 = vpack.c.b16 %v369, %v368
    %v382 = vpack.c.b16 %v371, %v370
    %v383 = vpack.c.b16 %v373, %v372
    %v384 = vpack.c.b16 %v375, %v374
    %v385 = vpack.c.b16 %v377, %v376
    %394 = vmatprep.subr.bf16.mxu0 0
    %395 = vmatpush1.bf16.msra.mxu0 %v378
    %396 = vmatprep.subr.bf16.mxu0 0
    %397 = vmatpush1.bf16.msra.mxu0 %v379
    %398 = vmatprep.subr.bf16.mxu0 0
    %399 = vmatpush1.bf16.msra.mxu0 %v380
    %400 = vmatprep.subr.bf16.mxu0 0
    %401 = vmatpush1.bf16.msra.mxu0 %v381
    %402 = vmatprep.subr.bf16.mxu0 0
    %403 = vmatpush1.bf16.msra.mxu0 %v382
    %404 = vmatprep.subr.bf16.mxu0 0
    %405 = vmatpush1.bf16.msra.mxu0 %v383
    %406 = vmatprep.subr.bf16.mxu0 0
    %407 = vmatpush1.bf16.msra.mxu0 %v384
    %408 = vmatprep.subr.bf16.mxu0 0
    %409 = vmatpush1.bf16.msra.mxu0 %v385
    %410 = vmatprep.subr.bf16.mxu0 0
    %411 = vmatpush1.bf16.msra.mxu0 0
    %412 = vmatprep.subr.bf16.mxu0 0
    %413 = vmatpush1.bf16.msra.mxu0 0
    %414 = vmatprep.subr.bf16.mxu0 0
    %415 = vmatpush1.bf16.msra.mxu0 0
    %416 = vmatprep.subr.bf16.mxu0 0
    %417 = vmatpush1.bf16.msra.mxu0 0
    %418 = vmatprep.subr.bf16.mxu0 0
    %419 = vmatpush1.bf16.msra.mxu0 0
    %420 = vmatprep.subr.bf16.mxu0 0
    %421 = vmatpush1.bf16.msra.mxu0 0
    %422 = vmatprep.subr.bf16.mxu0 0
    %423 = vmatpush1.bf16.msra.mxu0 0
    %424 = vmatprep.subr.bf16.mxu0 0
    %425 = vmatpush1.bf16.msra.mxu0 0
    %426 = vmatprep.mubr.bf16.mxu0 0
    %427 = vmatmul.mubr.bf16.gmra.mrb[0].mxu0 %v306
    %v428 = vpop.f32.mrb[0].mxu0
    %v429 = vadd.f32 0.0, %v428
    %v430 = vpop.f32.mrb[0].mxu0
    %v431 = vpop.f32.mrb[0].mxu0
    %v432 = vadd.f32 0.0, %v431
    %v433 = vpop.f32.mrb[0].mxu0
    %434 = vmatprep.mubr.bf16.mxu0 0
    %435 = vmatmul.mubr.bf16.gmra.mrb[0].mxu0 %v307
    %v436 = vpop.f32.mrb[0].mxu0
    %v437 = vadd.f32 0.0, %v436
    %v438 = vpop.f32.mrb[0].mxu0
    %v439 = vpop.f32.mrb[0].mxu0
    %v440 = vadd.f32 0.0, %v439
    %v441 = vpop.f32.mrb[0].mxu0
    %442 = vmatprep.mubr.bf16.mxu0 0
    %443 = vmatmul.mubr.bf16.gmra.mrb[0].mxu0 %v308
    %v444 = vpop.f32.mrb[0].mxu0
    %v445 = vadd.f32 0.0, %v444
    %v446 = vpop.f32.mrb[0].mxu0
    %v447 = vpop.f32.mrb[0].mxu0
    %v448 = vadd.f32 0.0, %v447
    %v449 = vpop.f32.mrb[0].mxu0
    %450 = vmatprep.mubr.bf16.mxu0 0
    %451 = vmatmul.mubr.bf16.gmra.mrb[0].mxu0 %v309
    %v452 = vpop.f32.mrb[0].mxu0
    %v453 = vadd.f32 0.0, %v452
    %v454 = vpop.f32.mrb[0].mxu0
    %v455 = vpop.f32.mrb[0].mxu0
    %v456 = vadd.f32 0.0, %v455
    %v457 = vpop.f32.mrb[0].mxu0
    %458 = vmatprep.mubr.bf16.mxu0 0
    %459 = vmatmul.mubr.bf16.gmra.mrb[0].mxu0 %v310
    %v460 = vpop.f32.mrb[0].mxu0
    %v461 = vadd.f32 0.0, %v460
    %v462 = vpop.f32.mrb[0].mxu0
    %v463 = vpop.f32.mrb[0].mxu0
    %v464 = vadd.f32 0.0, %v463
    %v465 = vpop.f32.mrb[0].mxu0
    %466 = vmatprep.mubr.bf16.mxu0 0
    %467 = vmatmul.mubr.bf16.gmra.mrb[0].mxu0 %v311
    %v468 = vpop.f32.mrb[0].mxu0
    %v469 = vadd.f32 0.0, %v468
    %v470 = vpop.f32.mrb[0].mxu0
    %v471 = vpop.f32.mrb[0].mxu0
    %v472 = vadd.f32 0.0, %v471
    %v473 = vpop.f32.mrb[0].mxu0
    %474 = vmatprep.mubr.bf16.mxu0 0
    %475 = vmatmul.mubr.bf16.gmra.mrb[0].mxu0 %v312
    %v476 = vpop.f32.mrb[0].mxu0
    %v477 = vadd.f32 0.0, %v476
    %v478 = vpop.f32.mrb[0].mxu0
    %v479 = vpop.f32.mrb[0].mxu0
    %v480 = vadd.f32 0.0, %v479
    %v481 = vpop.f32.mrb[0].mxu0
    %482 = vmatprep.mubr.bf16.mxu0 0
    %483 = vmatmul.mubr.bf16.gmra.mrb[0].mxu0 %v313
    %v484 = vpop.f32.mrb[0].mxu0
    %v485 = vadd.f32 0.0, %v484
    %v486 = vpop.f32.mrb[0].mxu0
    %v487 = vpop.f32.mrb[0].mxu0
    %v488 = vadd.f32 0.0, %v487
    %v489 = vpop.f32.mrb[0].mxu0
    %490 = vdwg.mxu0
    %v491 = vadd.f32 %v314, %v429
    %v492 = vadd.f32 %v315, %v432
    %v493 = vadd.f32 %v316, %v437
    %v494 = vadd.f32 %v317, %v440
    %v495 = vadd.f32 %v318, %v445
    %v496 = vadd.f32 %v319, %v448
    %v497 = vadd.f32 %v320, %v453
    %v498 = vadd.f32 %v321, %v456
    %v499 = vadd.f32 %v322, %v461
    %v500 = vadd.f32 %v323, %v464
    %v501 = vadd.f32 %v324, %v469
    %v502 = vadd.f32 %v325, %v472
    %v503 = vadd.f32 %v326, %v477
    %v504 = vadd.f32 %v327, %v480
    %v505 = vadd.f32 %v328, %v485
    %v506 = vadd.f32 %v329, %v488
    %507 = vst [vmem:[#allocation4] sm:$0xff] %v491
    %508 = vst [vmem:[#allocation4 + $0x8] sm:$0xff] %v492
    %509 = vst [vmem:[#allocation4 + $0x10] sm:$0xff] %v493
    %510 = vst [vmem:[#allocation4 + $0x18] sm:$0xff] %v494
    %511 = vst [vmem:[#allocation4 + $0x20] sm:$0xff] %v495
    %512 = vst [vmem:[#allocation4 + $0x28] sm:$0xff] %v496
    %513 = vst [vmem:[#allocation4 + $0x30] sm:$0xff] %v497
    %514 = vst [vmem:[#allocation4 + $0x38] sm:$0xff] %v498
    %515 = vst [vmem:[#allocation4 + $0x40] sm:$0xff] %v499
    %516 = vst [vmem:[#allocation4 + $0x48] sm:$0xff] %v500
    %517 = vst [vmem:[#allocation4 + $0x50] sm:$0xff] %v501
    %518 = vst [vmem:[#allocation4 + $0x58] sm:$0xff] %v502
    %519 = vst [vmem:[#allocation4 + $0x60] sm:$0xff] %v503
    %520 = vst [vmem:[#allocation4 + $0x68] sm:$0xff] %v504
    %521 = vst [vmem:[#allocation4 + $0x70] sm:$0xff] %v505
    %522 = vst [vmem:[#allocation4 + $0x78] sm:$0xff] %v506
    // Predicated region
    $region18: #{tpu_custom_call.1} parent=1 // pred_check
      %p523 = pneg %p55
    $region19: #{tpu_custom_call.1} parent=1 // pred_check_branch
      %525 = sbr.rel (%p523) target = $region21
    $region20: #{tpu_custom_call.1} parent=1 // pred_region
      %v526 = vcvt.s32.f32 %v98
      %v527 = vcvt.s32.f32 %v99
      %v528 = vcvt.s32.f32 %v100
      %v529 = vcvt.s32.f32 %v101
      %v530 = vcvt.s32.f32 %v102
      %v531 = vcvt.s32.f32 %v103
      %v532 = vcvt.s32.f32 %v104
      %v533 = vcvt.s32.f32 %v105
      %v534 = vcvt.s32.f32 %v106
      %v535 = vcvt.s32.f32 %v107
      %v536 = vcvt.s32.f32 %v108
      %v537 = vcvt.s32.f32 %v109
      %v538 = vcvt.s32.f32 %v110
      %v539 = vcvt.s32.f32 %v111
      %v540 = vcvt.s32.f32 %v112
      %v541 = vcvt.s32.f32 %v113
      %vm542 = vcmp.gt.s32.totalorder %v98, 0
      %vm543 = vcmp.gt.s32.totalorder %v99, 0
      %vm544 = vcmp.gt.s32.totalorder %v100, 0
      %vm545 = vcmp.gt.s32.totalorder %v101, 0
      %vm546 = vcmp.gt.s32.totalorder %v102, 0
      %vm547 = vcmp.gt.s32.totalorder %v103, 0
      %vm548 = vcmp.gt.s32.totalorder %v104, 0
      %vm549 = vcmp.gt.s32.totalorder %v105, 0
      %vm550 = vcmp.gt.s32.totalorder %v106, 0
      %vm551 = vcmp.gt.s32.totalorder %v107, 0
      %vm552 = vcmp.gt.s32.totalorder %v108, 0
      %vm553 = vcmp.gt.s32.totalorder %v109, 0
      %vm554 = vcmp.gt.s32.totalorder %v110, 0
      %vm555 = vcmp.gt.s32.totalorder %v111, 0
      %vm556 = vcmp.gt.s32.totalorder %v112, 0
      %vm557 = vcmp.gt.s32.totalorder %v113, 0
      %v558 = vmax.f32 %v526, 1.0
      %v559 = vmax.f32 %v527, 1.0
      %v560 = vmax.f32 %v528, 1.0
      %v561 = vmax.f32 %v529, 1.0
      %v562 = vmax.f32 %v530, 1.0
      %v563 = vmax.f32 %v531, 1.0
      %v564 = vmax.f32 %v532, 1.0
      %v565 = vmax.f32 %v533, 1.0
      %v566 = vmax.f32 %v534, 1.0
      %v567 = vmax.f32 %v535, 1.0
      %v568 = vmax.f32 %v536, 1.0
      %v569 = vmax.f32 %v537, 1.0
      %v570 = vmax.f32 %v538, 1.0
      %v571 = vmax.f32 %v539, 1.0
      %v572 = vmax.f32 %v540, 1.0
      %v573 = vmax.f32 %v541, 1.0
      %v574 = vrcp.pop %v558
      %v575 = vmul.f32 1.0, %v574
      %v576 = vrcp.pop %v559
      %v577 = vmul.f32 1.0, %v576
      %v578 = vrcp.pop %v560
      %v579 = vmul.f32 1.0, %v578
      %v580 = vrcp.pop %v561
      %v581 = vmul.f32 1.0, %v580
      %v582 = vrcp.pop %v562
      %v583 = vmul.f32 1.0, %v582
      %v584 = vrcp.pop %v563
      %v585 = vmul.f32 1.0, %v584
      %v586 = vrcp.pop %v564
      %v587 = vmul.f32 1.0, %v586
      %v588 = vrcp.pop %v565
      %v589 = vmul.f32 1.0, %v588
      %v590 = vrcp.pop %v566
      %v591 = vmul.f32 1.0, %v590
      %v592 = vrcp.pop %v567
      %v593 = vmul.f32 1.0, %v592
      %v594 = vrcp.pop %v568
      %v595 = vmul.f32 1.0, %v594
      %v596 = vrcp.pop %v569
      %v597 = vmul.f32 1.0, %v596
      %v598 = vrcp.pop %v570
      %v599 = vmul.f32 1.0, %v598
      %v600 = vrcp.pop %v571
      %v601 = vmul.f32 1.0, %v600
      %v602 = vrcp.pop %v572
      %v603 = vmul.f32 1.0, %v602
      %v604 = vrcp.pop %v573
      %v605 = vmul.f32 1.0, %v604
      %v606 = vsel %vm542, %v575, 0.0
      %v607 = vsel %vm543, %v577, 0.0
      %v608 = vsel %vm544, %v579, 0.0
      %v609 = vsel %vm545, %v581, 0.0
      %v610 = vsel %vm546, %v583, 0.0
      %v611 = vsel %vm547, %v585, 0.0
      %v612 = vsel %vm548, %v587, 0.0
      %v613 = vsel %vm549, %v589, 0.0
      %v614 = vsel %vm550, %v591, 0.0
      %v615 = vsel %vm551, %v593, 0.0
      %v616 = vsel %vm552, %v595, 0.0
      %v617 = vsel %vm553, %v597, 0.0
      %v618 = vsel %vm554, %v599, 0.0
      %v619 = vsel %vm555, %v601, 0.0
      %v620 = vsel %vm556, %v603, 0.0
      %v621 = vsel %vm557, %v605, 0.0
      %v622 = vld [vmem:[#allocation4] sm:$0xff]
      %v623 = vld [vmem:[#allocation4 + $0x8] sm:$0xff]
      %v624 = vld [vmem:[#allocation4 + $0x10] sm:$0xff]
      %v625 = vld [vmem:[#allocation4 + $0x18] sm:$0xff]
      %v626 = vld [vmem:[#allocation4 + $0x20] sm:$0xff]
      %v627 = vld [vmem:[#allocation4 + $0x28] sm:$0xff]
      %v628 = vld [vmem:[#allocation4 + $0x30] sm:$0xff]
      %v629 = vld [vmem:[#allocation4 + $0x38] sm:$0xff]
      %v630 = vld [vmem:[#allocation4 + $0x40] sm:$0xff]
      %v631 = vld [vmem:[#allocation4 + $0x48] sm:$0xff]
      %v632 = vld [vmem:[#allocation4 + $0x50] sm:$0xff]
      %v633 = vld [vmem:[#allocation4 + $0x58] sm:$0xff]
      %v634 = vld [vmem:[#allocation4 + $0x60] sm:$0xff]
      %v635 = vld [vmem:[#allocation4 + $0x68] sm:$0xff]
      %v636 = vld [vmem:[#allocation4 + $0x70] sm:$0xff]
      %v637 = vld [vmem:[#allocation4 + $0x78] sm:$0xff]
      %639 = vset.pattern.permute.xlu0 0
      %640 = vperm.xlu0 %639, %v606
      %v641 = vpop.permute.xlu0 %640
      %644 = vset.pattern.permute.xlu0 0
      %645 = vperm.xlu0 %644, %v607
      %v646 = vpop.permute.xlu0 %645
      %649 = vset.pattern.permute.xlu0 0
      %650 = vperm.xlu0 %649, %v608
      %v651 = vpop.permute.xlu0 %650
      %654 = vset.pattern.permute.xlu0 0
      %655 = vperm.xlu0 %654, %v609
      %v656 = vpop.permute.xlu0 %655
      %659 = vset.pattern.permute.xlu0 0
      %660 = vperm.xlu0 %659, %v610
      %v661 = vpop.permute.xlu0 %660
      %664 = vset.pattern.permute.xlu0 0
      %665 = vperm.xlu0 %664, %v611
      %v666 = vpop.permute.xlu0 %665
      %669 = vset.pattern.permute.xlu0 0
      %670 = vperm.xlu0 %669, %v612
      %v671 = vpop.permute.xlu0 %670
      %674 = vset.pattern.permute.xlu0 0
      %675 = vperm.xlu0 %674, %v613
      %v676 = vpop.permute.xlu0 %675
      %679 = vset.pattern.permute.xlu0 0
      %680 = vperm.xlu0 %679, %v614
      %v681 = vpop.permute.xlu0 %680
      %684 = vset.pattern.permute.xlu0 0
      %685 = vperm.xlu0 %684, %v615
      %v686 = vpop.permute.xlu0 %685
      %689 = vset.pattern.permute.xlu0 0
      %690 = vperm.xlu0 %689, %v616
      %v691 = vpop.permute.xlu0 %690
      %694 = vset.pattern.permute.xlu0 0
      %695 = vperm.xlu0 %694, %v617
      %v696 = vpop.permute.xlu0 %695
      %699 = vset.pattern.permute.xlu0 0
      %700 = vperm.xlu0 %699, %v618
      %v701 = vpop.permute.xlu0 %700
      %704 = vset.pattern.permute.xlu0 0
      %705 = vperm.xlu0 %704, %v619
      %v706 = vpop.permute.xlu0 %705
      %709 = vset.pattern.permute.xlu0 0
      %710 = vperm.xlu0 %709, %v620
      %v711 = vpop.permute.xlu0 %710
      %714 = vset.pattern.permute.xlu0 0
      %715 = vperm.xlu0 %714, %v621
      %v716 = vpop.permute.xlu0 %715
      %v718 = vmul.f32 %v622, %v641
      %v719 = vmul.f32 %v623, %v646
      %v720 = vmul.f32 %v624, %v651
      %v721 = vmul.f32 %v625, %v656
      %v722 = vmul.f32 %v626, %v661
      %v723 = vmul.f32 %v627, %v666
      %v724 = vmul.f32 %v628, %v671
      %v725 = vmul.f32 %v629, %v676
      %v726 = vmul.f32 %v630, %v681
      %v727 = vmul.f32 %v631, %v686
      %v728 = vmul.f32 %v632, %v691
      %v729 = vmul.f32 %v633, %v696
      %v730 = vmul.f32 %v634, %v701
      %v731 = vmul.f32 %v635, %v706
      %v732 = vmul.f32 %v636, %v711
      %v733 = vmul.f32 %v637, %v716
      %734 = vst [vmem:[#allocation4] sm:$0xff] %v718
      %735 = vst [vmem:[#allocation4 + $0x8] sm:$0xff] %v719
      %736 = vst [vmem:[#allocation4 + $0x10] sm:$0xff] %v720
      %737 = vst [vmem:[#allocation4 + $0x18] sm:$0xff] %v721
      %738 = vst [vmem:[#allocation4 + $0x20] sm:$0xff] %v722
      %739 = vst [vmem:[#allocation4 + $0x28] sm:$0xff] %v723
      %740 = vst [vmem:[#allocation4 + $0x30] sm:$0xff] %v724
      %741 = vst [vmem:[#allocation4 + $0x38] sm:$0xff] %v725
      %742 = vst [vmem:[#allocation4 + $0x40] sm:$0xff] %v726
      %743 = vst [vmem:[#allocation4 + $0x48] sm:$0xff] %v727
      %744 = vst [vmem:[#allocation4 + $0x50] sm:$0xff] %v728
      %745 = vst [vmem:[#allocation4 + $0x58] sm:$0xff] %v729
      %746 = vst [vmem:[#allocation4 + $0x60] sm:$0xff] %v730
      %747 = vst [vmem:[#allocation4 + $0x68] sm:$0xff] %v731
      %748 = vst [vmem:[#allocation4 + $0x70] sm:$0xff] %v732
      %749 = vst [vmem:[#allocation4 + $0x78] sm:$0xff] %v733
    $region21: #{tpu_custom_call.1} parent=1 // pred_fallthru
      _
    // Predicated region
    $region22: #{tpu_custom_call.1} parent=1 // pred_check
      _
    $region23: #{tpu_custom_call.1} parent=1 // pred_check_branch
      %751 = sbr.rel (0) target = $region25
    $region24: #{tpu_custom_call.1} parent=1 // pred_region
      %s753 = ssub.s32 2048, 2048
      %754 = vsyncadd [#allocation5], %s753
      %s755 = sshll.u32 [#allocation4], 4
      %s756 = int_to_ptr.vmem [resolvable:$true] %s755
      %761 = dma.vmem_to_hbm [thread:$0]  %s756, 2048, %s4, [#allocation5], 128, 128, 8
    $region25: #{tpu_custom_call.1} parent=1 // pred_fallthru
      _
    // Predicated region
    $region26: #{tpu_custom_call.1} parent=1 // pred_check
      _
    $region27: #{tpu_custom_call.1} parent=1 // pred_check_branch
      %763 = sbr.rel (0) target = $region29
    $region28: #{tpu_custom_call.1} parent=1 // pred_region
      %764 = dma.done [#allocation5], 2048
    $region29: #{tpu_custom_call.1} parent=1 // pred_fallthru
      _
    %765 = vsyncpa [#allocation5], 1

</llo_original>
